<compile_context>
chip_gen: v6e
topology: v6e:2x2x1
jax: 0.10.0
libtpu: 0.0.40
codegen_flags: <defaults>
</compile_context>

<pallas_src>
import functools

import jax
import jax.numpy as jnp
from jax.experimental import pallas as pl
from jax.experimental.pallas import tpu as pltpu


# ----------------------------- shared helpers -------------------------------

def _excite_f32(mean, w1, b1, w2, b2):
    """(C,1) channel mean -> (C,1) sigmoid gate; tiny FC evaluated in f32."""
    h = jnp.dot(w1.astype(jnp.float32), mean, preferred_element_type=jnp.float32)
    h = jnp.maximum(h + b1.astype(jnp.float32), 0.0)
    z = jnp.dot(w2.astype(jnp.float32), h, preferred_element_type=jnp.float32)
    z = z + b2.astype(jnp.float32)
    return 1.0 / (1.0 + jnp.exp(-z))


# --------------------------- fused single-pass path --------------------------

def _se_fused_kernel(rgb_ref, depth_ref,
                     w1r_ref, b1r_ref, w2r_ref, b2r_ref,
                     w1d_ref, b1d_ref, w2d_ref, b2d_ref,
                     out_ref, *, inv_hw):
    """Whole (C, HW) image pair resident in VMEM: pool + excite + apply."""
    rgb = rgb_ref[...]          # (C, HW) native dtype
    depth = depth_ref[...]

    mean_rgb = jnp.sum(rgb.astype(jnp.float32), axis=1, keepdims=True) * inv_hw
    mean_depth = jnp.sum(depth.astype(jnp.float32), axis=1, keepdims=True) * inv_hw

    g_rgb = _excite_f32(mean_rgb, w1r_ref[...], b1r_ref[...],
                        w2r_ref[...], b2r_ref[...])
    g_depth = _excite_f32(mean_depth, w1d_ref[...], b1d_ref[...],
                          w2d_ref[...], b2d_ref[...])

    # Multiply-add in the input dtype (bf16-native on v6e/v7x; f32 for f32).
    out = rgb * g_rgb.astype(rgb.dtype) + depth * g_depth.astype(depth.dtype)
    out_ref[...] = out.astype(out_ref.dtype)


# ----------------------------- two-pass fallback -----------------------------

def _se_pool_kernel(rgb_ref, depth_ref, sum_rgb_ref, sum_depth_ref,
                    acc_rgb, acc_depth, *, hw, tile, chunk, mask_needed):
    """Tiled global sum over H*W.  Streaming phase is pure VPU adds into a
    lane-wide (C, chunk) f32 scratch; the cross-lane XLU reduce happens only in
    the finalize step."""
    t = pl.program_id(1)

    @pl.when(t == 0)
    def _():
        acc_rgb[...] = jnp.zeros_like(acc_rgb)
        acc_depth[...] = jnp.zeros_like(acc_depth)

    n_chunks = tile // chunk

    def accumulate(x_ref, acc):
        for j in range(n_chunks):
            x = x_ref[:, j * chunk:(j + 1) * chunk].astype(jnp.float32)
            if mask_needed:
                lane = jax.lax.broadcasted_iota(jnp.int32, x.shape, 1)
                pos = t * tile + j * chunk + lane
                x = jnp.where(pos < hw, x, 0.0)
            acc[...] += x

    accumulate(rgb_ref, acc_rgb)
    accumulate(depth_ref, acc_depth)

    @pl.when(t == pl.num_programs(1) - 1)
    def _():
        sum_rgb_ref[...] = jnp.sum(acc_rgb[...], axis=1, keepdims=True)
        sum_depth_ref[...] = jnp.sum(acc_depth[...], axis=1, keepdims=True)


def _se_apply_kernel(rgb_ref, depth_ref, g_rgb_ref, g_depth_ref, out_ref):
    """out = rgb * gate_rgb + depth * gate_depth (gates broadcast over lanes),
    computed in the native input dtype."""
    out = rgb_ref[...] * g_rgb_ref[...] + depth_ref[...] * g_depth_ref[...]
    out_ref[...] = out.astype(out_ref.dtype)


def _choose_hw_tile(hw, c, dtype_bytes, budget_bytes, cap_lanes=2048):
    """Multiple-of-128 spatial tile bounded by the apply-kernel VMEM footprint
    (3 streams x 2 buffers x C x tile x dtype_bytes).  512-2048 lanes already
    saturates the HBM roofline, so cap there."""
    if hw < 128:
        return hw                                   # single full-extent block
    budget_tile = budget_bytes // (6 * c * dtype_bytes)
    tile = max(128, (min(budget_tile, cap_lanes) // 128) * 128)
    if hw % 128 == 0:
        tile = min(tile, hw)
        while hw % tile != 0:                       # largest 128-multiple divisor
            tile -= 128
    else:
        tile = min(tile, (hw // 128) * 128)         # cdiv grid + masked tail
    return tile


# --------------------------------- wrapper ----------------------------------

def squeeze_excite_fusion_add(rgb, depth, params, *,
                              fused_budget_bytes=40 << 20,
                              tile_budget_bytes=32 << 20,
                              hw_tile=None):
    """Pallas TPU implementation of SqueezeAndExciteFusionAdd.forward.

    Args:
      rgb, depth: (N, C, H, W) arrays (same shape/dtype).
      params: {"rgb": (w1, b1, w2, b2), "depth": (w1, b1, w2, b2)} with
              w1: (C//r, C), b1: (C//r,), w2: (C, C//r), b2: (C,)
              (1x1 conv weights with the trailing 1x1 dims squeezed).
    Returns:
      (N, C, H, W) array, same dtype as the inputs.
    """
    assert rgb.shape == depth.shape and rgb.dtype == depth.dtype
    n, c, h, w = rgb.shape
    hw = h * w
    dtype = rgb.dtype
    db = jnp.dtype(dtype).itemsize

    # Pure layout reshapes; inputs stream in their native dtype.
    rgb_f = rgb.reshape(n, c, hw)
    depth_f = depth.reshape(n, c, hw)

    w1r, b1r, w2r, b2r = params["rgb"]
    w1d, b1d, w2d, b2d = params["depth"]
    cr = w1r.shape[0]
    b1r_c = b1r.reshape(cr, 1)
    b2r_c = b2r.reshape(c, 1)
    b1d_c = b1d.reshape(cr, 1)
    b2d_c = b2d.reshape(c, 1)

    # ---------------- fused single-pass path (3x HBM bytes) ----------------
    # Footprint: 3 streams (rgb, depth, out) x 2 pipeline buffers + f32 slack
    # for the in-kernel mean reduction temporaries.
    fused_bytes = 6 * c * hw * db + 2 * c * hw * 4
    if hw_tile is None and fused_bytes <= fused_budget_bytes:
        vmem_limit = max(fused_bytes + (4 << 20), 16 << 20)
        x_spec = pl.BlockSpec((None, c, hw), lambda i: (i, 0, 0))

        def w_spec(a):
            return pl.BlockSpec(a.shape, lambda i: (0, 0))

        out = pl.pallas_call(
            functools.partial(_se_fused_kernel, inv_hw=1.0 / float(hw)),
            out_shape=jax.ShapeDtypeStruct((n, c, hw), dtype),
            grid_spec=pltpu.PrefetchScalarGridSpec(
                num_scalar_prefetch=0,
                grid=(n,),
                in_specs=[x_spec, x_spec,
                          w_spec(w1r), w_spec(b1r_c), w_spec(w2r), w_spec(b2r_c),
                          w_spec(w1d), w_spec(b1d_c), w_spec(w2d), w_spec(b2d_c)],
                out_specs=x_spec),
            compiler_params=pltpu.CompilerParams(
                dimension_semantics=("parallel",),
                vmem_limit_bytes=vmem_limit),
        )(rgb_f, depth_f, w1r, b1r_c, w2r, b2r_c, w1d, b1d_c, w2d, b2d_c)
        return out.reshape(n, c, h, w)

    # ------------------------- two-pass fallback ---------------------------
    tile = (_choose_hw_tile(hw, c, db, tile_budget_bytes)
            if hw_tile is None else hw_tile)
    n_t = pl.cdiv(hw, tile)
    mask_needed = (hw % tile) != 0
    chunk = 128 if tile % 128 == 0 else tile

    x_spec = pl.BlockSpec((None, c, tile), lambda i, t: (i, 0, t))
    col_spec = pl.BlockSpec((None, c, 1), lambda i, t: (i, 0, 0))

    # Pass 1: per-image channel sums (pooling only; no weights in this kernel).
    pool_vmem = max(2 * 2 * c * tile * db + 4 * c * 4 + 2 * c * chunk * 4
                    + (4 << 20), 16 << 20)
    sum_rgb, sum_depth = pl.pallas_call(
        functools.partial(_se_pool_kernel, hw=hw, tile=tile, chunk=chunk,
                          mask_needed=mask_needed),
        out_shape=(jax.ShapeDtypeStruct((n, c, 1), jnp.float32),
                   jax.ShapeDtypeStruct((n, c, 1), jnp.float32)),
        grid_spec=pltpu.PrefetchScalarGridSpec(
            num_scalar_prefetch=0,
            grid=(n, n_t),
            in_specs=[x_spec, x_spec],
            out_specs=[col_spec, col_spec],
            scratch_shapes=[pltpu.VMEM((c, chunk), jnp.float32),
                            pltpu.VMEM((c, chunk), jnp.float32)]),
        compiler_params=pltpu.CompilerParams(
            dimension_semantics=("parallel", "arbitrary"),
            vmem_limit_bytes=pool_vmem),
    )(rgb_f, depth_f)

    # Tiny excitation FC, batched over N in plain JAX (proper (N,C)@(C,Cr)
    # matmuls instead of serialized per-image 1-column MXU work in-kernel).
    inv_hw = 1.0 / float(hw)

    def excite_batched(sums_nc1, w1, b1, w2, b2):
        m = sums_nc1[:, :, 0].astype(jnp.float32) * inv_hw            # (N, C)
        hdn = jnp.maximum(m @ w1.astype(jnp.float32).T
                          + b1.astype(jnp.float32), 0.0)              # (N, Cr)
        z = hdn @ w2.astype(jnp.float32).T + b2.astype(jnp.float32)   # (N, C)
        return jax.nn.sigmoid(z)[:, :, None]                          # (N, C, 1)

    g_rgb = excite_batched(sum_rgb, w1r, b1r, w2r, b2r).astype(dtype)
    g_depth = excite_batched(sum_depth, w1d, b1d, w2d, b2d).astype(dtype)

    # Pass 2: streaming apply, fully parallel grid, lane-dense output blocks.
    apply_vmem = max(3 * 2 * c * tile * db + 4 * c * db + (4 << 20), 16 << 20)
    out = pl.pallas_call(
        _se_apply_kernel,
        out_shape=jax.ShapeDtypeStruct((n, c, hw), dtype),
        grid_spec=pltpu.PrefetchScalarGridSpec(
            num_scalar_prefetch=0,
            grid=(n, n_t),
            in_specs=[x_spec, x_spec, col_spec, col_spec],
            out_specs=x_spec),
        compiler_params=pltpu.CompilerParams(
            dimension_semantics=("parallel", "parallel"),
            vmem_limit_bytes=apply_vmem),
    )(rgb_f, depth_f, g_rgb, g_depth)

    return out.reshape(n, c, h, w)


# ----------------------------------- test -----------------------------------

if __name__ == "__main__":
    key = jax.random.PRNGKey(0)
    keys = jax.random.split(key, 4)

    # Small shapes consistent with the module: default reduction=16 needs
    # channels >= 16, so use C=32 -> hidden = 2.
    N, C, H, W = 2, 32, 16, 16
    REDUCTION = 16
    CR = C // REDUCTION

    rgb = jax.random.normal(keys[0], (N, C, H, W), jnp.float32)
    depth = jax.random.normal(keys[1], (N, C, H, W), jnp.float32)

    def make_branch(k):
        k1, k2, k3, k4 = jax.random.split(k, 4)
        w1 = jax.random.normal(k1, (CR, C), jnp.float32) * 0.2
        b1 = jax.random.normal(k2, (CR,), jnp.float32) * 0.1
        w2 = jax.random.normal(k3, (C, CR), jnp.float32) * 0.2
        b2 = jax.random.normal(k4, (C,), jnp.float32) * 0.1
        return (w1, b1, w2, b2)

    params = {"rgb": make_branch(keys[2]), "depth": make_branch(keys[3])}

    # Pure-JAX reference mirroring the PyTorch module.
    def ref_se(x, w1, b1, w2, b2):
        m = jnp.mean(x, axis=(2, 3))                       # adaptive_avg_pool2d
        hdn = jnp.maximum(m @ w1.T + b1, 0.0)              # 1x1 conv + ReLU
        g = jax.nn.sigmoid(hdn @ w2.T + b2)                # 1x1 conv + sigmoid
        return x * g[:, :, None, None]

    ref = ref_se(rgb, *params["rgb"]) + ref_se(depth, *params["depth"])

    # 1) Fused single-pass path (default: image pair resident in VMEM).
    out_fused = jax.block_until_ready(squeeze_excite_fusion_add(rgb, depth, params))
    assert out_fused.shape == ref.shape and out_fused.dtype == ref.dtype
    assert jnp.allclose(out_fused, ref, atol=1e-5, rtol=1e-5), \
        float(jnp.max(jnp.abs(out_fused - ref)))

    # 2) Two-pass fallback, forced, with 2 spatial tiles (exercises the pooled
    #    accumulation across grid steps and the batched JAX excitation FC).
    out_two = jax.block_until_ready(
        squeeze_excite_fusion_add(rgb, depth, params,
                                  fused_budget_bytes=0, hw_tile=128))
    assert jnp.allclose(out_two, ref, atol=1e-5, rtol=1e-5), \
        float(jnp.max(jnp.abs(out_two - ref)))

    # 3) Two-pass fallback with a ragged (non-multiple-of-128) spatial size:
    #    exercises the cdiv grid + masked-tail pooling path (H*W = 160).
    rgb_r = rgb[:, :, :, :10]
    depth_r = depth[:, :, :, :10]
    ref_r = ref_se(rgb_r, *params["rgb"]) + ref_se(depth_r, *params["depth"])
    out_r = jax.block_until_ready(
        squeeze_excite_fusion_add(rgb_r, depth_r, params, fused_budget_bytes=0))
    assert jnp.allclose(out_r, ref_r, atol=1e-5, rtol=1e-5), \
        float(jnp.max(jnp.abs(out_r - ref_r)))

    print("KERNEL_OK")
</pallas_src>

<mosaic_0001>
module attributes {stable_mosaic.version = 11 : i64} {
  func.func @_se_fused_kernel(%arg0: i32, %arg1: memref<1x32x256xf32, #tpu.memory_space<vmem>>, %arg2: memref<1x32x256xf32, #tpu.memory_space<vmem>>, %arg3: memref<2x32xf32, #tpu.memory_space<vmem>>, %arg4: memref<2x1xf32, #tpu.memory_space<vmem>>, %arg5: memref<32x2xf32, #tpu.memory_space<vmem>>, %arg6: memref<32x1xf32, #tpu.memory_space<vmem>>, %arg7: memref<2x32xf32, #tpu.memory_space<vmem>>, %arg8: memref<2x1xf32, #tpu.memory_space<vmem>>, %arg9: memref<32x2xf32, #tpu.memory_space<vmem>>, %arg10: memref<32x1xf32, #tpu.memory_space<vmem>>, %arg11: memref<1x32x256xf32, #tpu.memory_space<vmem>>) attributes {dimension_semantics = [#tpu.dimension_semantics<parallel>], iteration_bounds = array<i64: 2>, scalar_prefetch = 0 : i64, scratch_operands = 0 : i64, tpu.core_type = #tpu.core_type<tc>, window_params = [{transform_indices = @transform_0, window_bounds = array<i64: 1, 32, 256>}, {transform_indices = @transform_1, window_bounds = array<i64: 1, 32, 256>}, {pipeline_mode = #tpu.pipeline_mode<synchronous>, transform_indices = @transform_2, window_bounds = array<i64: 2, 32>}, {pipeline_mode = #tpu.pipeline_mode<synchronous>, transform_indices = @transform_3, window_bounds = array<i64: 2, 1>}, {pipeline_mode = #tpu.pipeline_mode<synchronous>, transform_indices = @transform_4, window_bounds = array<i64: 32, 2>}, {pipeline_mode = #tpu.pipeline_mode<synchronous>, transform_indices = @transform_5, window_bounds = array<i64: 32, 1>}, {pipeline_mode = #tpu.pipeline_mode<synchronous>, transform_indices = @transform_6, window_bounds = array<i64: 2, 32>}, {pipeline_mode = #tpu.pipeline_mode<synchronous>, transform_indices = @transform_7, window_bounds = array<i64: 2, 1>}, {pipeline_mode = #tpu.pipeline_mode<synchronous>, transform_indices = @transform_8, window_bounds = array<i64: 32, 2>}, {pipeline_mode = #tpu.pipeline_mode<synchronous>, transform_indices = @transform_9, window_bounds = array<i64: 32, 1>}, {transform_indices = @transform_10, window_bounds = array<i64: 1, 32, 256>}]} {
    %c0 = arith.constant 0 : index
    %c0_0 = arith.constant 0 : index
    %c0_1 = arith.constant 0 : index
    %0 = vector.load %arg1[%c0, %c0_0, %c0_1] : memref<1x32x256xf32, #tpu.memory_space<vmem>>, vector<1x32x256xf32>
    %1 = vector.shape_cast %0 : vector<1x32x256xf32> to vector<32x256xf32>
    %c0_2 = arith.constant 0 : index
    %c0_3 = arith.constant 0 : index
    %c0_4 = arith.constant 0 : index
    %2 = vector.load %arg2[%c0_2, %c0_3, %c0_4] : memref<1x32x256xf32, #tpu.memory_space<vmem>>, vector<1x32x256xf32>
    %3 = vector.shape_cast %2 : vector<1x32x256xf32> to vector<32x256xf32>
    %cst = arith.constant dense<0.000000e+00> : vector<32xf32>
    %4 = vector.multi_reduction <add>, %1, %cst [1] : vector<32x256xf32> to vector<32xf32>
    %5 = vector.shape_cast %4 : vector<32xf32> to vector<32x1xf32>
    %cst_5 = arith.constant 3.906250e-03 : f32
    %6 = vector.broadcast %cst_5 : f32 to vector<32x1xf32>
    %7 = arith.mulf %5, %6 : vector<32x1xf32>
    %cst_6 = arith.constant dense<0.000000e+00> : vector<32xf32>
    %8 = vector.multi_reduction <add>, %3, %cst_6 [1] : vector<32x256xf32> to vector<32xf32>
    %9 = vector.shape_cast %8 : vector<32xf32> to vector<32x1xf32>
    %cst_7 = arith.constant 3.906250e-03 : f32
    %10 = vector.broadcast %cst_7 : f32 to vector<32x1xf32>
    %11 = arith.mulf %9, %10 : vector<32x1xf32>
    %c0_8 = arith.constant 0 : index
    %c0_9 = arith.constant 0 : index
    %12 = vector.load %arg3[%c0_8, %c0_9] : memref<2x32xf32, #tpu.memory_space<vmem>>, vector<2x32xf32>
    %c0_10 = arith.constant 0 : index
    %c0_11 = arith.constant 0 : index
    %13 = vector.load %arg4[%c0_10, %c0_11] : memref<2x1xf32, #tpu.memory_space<vmem>>, vector<2x1xf32>
    %c0_12 = arith.constant 0 : index
    %c0_13 = arith.constant 0 : index
    %14 = vector.load %arg5[%c0_12, %c0_13] : memref<32x2xf32, #tpu.memory_space<vmem>>, vector<32x2xf32>
    %c0_14 = arith.constant 0 : index
    %c0_15 = arith.constant 0 : index
    %15 = vector.load %arg6[%c0_14, %c0_15] : memref<32x1xf32, #tpu.memory_space<vmem>>, vector<32x1xf32>
    %cst_16 = arith.constant dense<0.000000e+00> : vector<2x1xf32>
    %16 = tpu.matmul %12, %7, %cst_16 {dimension_numbers = #tpu.dot_dimension_numbers<[1], [0], [0], [1], [0, 0, 1, 1], [], []>} : vector<2x32xf32>, vector<32x1xf32>, vector<2x1xf32> -> vector<2x1xf32>
    %17 = arith.addf %16, %13 : vector<2x1xf32>
    %cst_17 = arith.constant 0.000000e+00 : f32
    %18 = vector.broadcast %cst_17 : f32 to vector<2x1xf32>
    %19 = arith.maximumf %17, %18 : vector<2x1xf32>
    %cst_18 = arith.constant dense<0.000000e+00> : vector<32x1xf32>
    %20 = tpu.matmul %14, %19, %cst_18 {dimension_numbers = #tpu.dot_dimension_numbers<[1], [0], [0], [1], [0, 0, 1, 1], [], []>} : vector<32x2xf32>, vector<2x1xf32>, vector<32x1xf32> -> vector<32x1xf32>
    %21 = arith.addf %20, %15 : vector<32x1xf32>
    %cst_19 = arith.constant 0.000000e+00 : f32
    %22 = vector.broadcast %cst_19 : f32 to vector<32x1xf32>
    %23 = arith.subf %22, %21 : vector<32x1xf32>
    %24 = math.exp %23 : vector<32x1xf32>
    %cst_20 = arith.constant 1.000000e+00 : f32
    %25 = vector.broadcast %cst_20 : f32 to vector<32x1xf32>
    %26 = arith.addf %25, %24 : vector<32x1xf32>
    %cst_21 = arith.constant 1.000000e+00 : f32
    %27 = vector.broadcast %cst_21 : f32 to vector<32x1xf32>
    %28 = arith.divf %27, %26 : vector<32x1xf32>
    %c0_22 = arith.constant 0 : index
    %c0_23 = arith.constant 0 : index
    %29 = vector.load %arg7[%c0_22, %c0_23] : memref<2x32xf32, #tpu.memory_space<vmem>>, vector<2x32xf32>
    %c0_24 = arith.constant 0 : index
    %c0_25 = arith.constant 0 : index
    %30 = vector.load %arg8[%c0_24, %c0_25] : memref<2x1xf32, #tpu.memory_space<vmem>>, vector<2x1xf32>
    %c0_26 = arith.constant 0 : index
    %c0_27 = arith.constant 0 : index
    %31 = vector.load %arg9[%c0_26, %c0_27] : memref<32x2xf32, #tpu.memory_space<vmem>>, vector<32x2xf32>
    %c0_28 = arith.constant 0 : index
    %c0_29 = arith.constant 0 : index
    %32 = vector.load %arg10[%c0_28, %c0_29] : memref<32x1xf32, #tpu.memory_space<vmem>>, vector<32x1xf32>
    %cst_30 = arith.constant dense<0.000000e+00> : vector<2x1xf32>
    %33 = tpu.matmul %29, %11, %cst_30 {dimension_numbers = #tpu.dot_dimension_numbers<[1], [0], [0], [1], [0, 0, 1, 1], [], []>} : vector<2x32xf32>, vector<32x1xf32>, vector<2x1xf32> -> vector<2x1xf32>
    %34 = arith.addf %33, %30 : vector<2x1xf32>
    %cst_31 = arith.constant 0.000000e+00 : f32
    %35 = vector.broadcast %cst_31 : f32 to vector<2x1xf32>
    %36 = arith.maximumf %34, %35 : vector<2x1xf32>
    %cst_32 = arith.constant dense<0.000000e+00> : vector<32x1xf32>
    %37 = tpu.matmul %31, %36, %cst_32 {dimension_numbers = #tpu.dot_dimension_numbers<[1], [0], [0], [1], [0, 0, 1, 1], [], []>} : vector<32x2xf32>, vector<2x1xf32>, vector<32x1xf32> -> vector<32x1xf32>
    %38 = arith.addf %37, %32 : vector<32x1xf32>
    %cst_33 = arith.constant 0.000000e+00 : f32
    %39 = vector.broadcast %cst_33 : f32 to vector<32x1xf32>
    %40 = arith.subf %39, %38 : vector<32x1xf32>
    %41 = math.exp %40 : vector<32x1xf32>
    %cst_34 = arith.constant 1.000000e+00 : f32
    %42 = vector.broadcast %cst_34 : f32 to vector<32x1xf32>
    %43 = arith.addf %42, %41 : vector<32x1xf32>
    %cst_35 = arith.constant 1.000000e+00 : f32
    %44 = vector.broadcast %cst_35 : f32 to vector<32x1xf32>
    %45 = arith.divf %44, %43 : vector<32x1xf32>
    %46 = vector.broadcast %28 : vector<32x1xf32> to vector<32x256xf32>
    %47 = arith.mulf %1, %46 : vector<32x256xf32>
    %48 = vector.broadcast %45 : vector<32x1xf32> to vector<32x256xf32>
    %49 = arith.mulf %3, %48 : vector<32x256xf32>
    %50 = arith.addf %47, %49 : vector<32x256xf32>
    %c0_36 = arith.constant 0 : index
    %c0_37 = arith.constant 0 : index
    %c0_38 = arith.constant 0 : index
    %51 = vector.load %arg11[%c0_36, %c0_37, %c0_38] : memref<1x32x256xf32, #tpu.memory_space<vmem>>, vector<1x32x256xf32>
    %52 = vector.shape_cast %51 : vector<1x32x256xf32> to vector<32x256xf32>
    %53 = vector.shape_cast %50 : vector<32x256xf32> to vector<1x32x256xf32>
    tpu.vector_store %arg11[%c0_36, %c0_37, %c0_38], %53 {strides = array<i32>} : memref<1x32x256xf32, #tpu.memory_space<vmem>>, vector<1x32x256xf32>,
    return
  }
  func.func @transform_0(%arg0: i32) -> (i32, i32, i32) {
    %c0_i32 = arith.constant 0 : i32
    %c0_i32_0 = arith.constant 0 : i32
    %c0_i32_1 = arith.constant 0 : i32
    return %arg0, %c0_i32, %c0_i32_0 : i32, i32, i32
  }
  func.func @transform_1(%arg0: i32) -> (i32, i32, i32) {
    %c0_i32 = arith.constant 0 : i32
    %c0_i32_0 = arith.constant 0 : i32
    %c0_i32_1 = arith.constant 0 : i32
    return %arg0, %c0_i32, %c0_i32_0 : i32, i32, i32
  }
  func.func @transform_2(%arg0: i32) -> (i32, i32) {
    %c0_i32 = arith.constant 0 : i32
    %c0_i32_0 = arith.constant 0 : i32
    %c0_i32_1 = arith.constant 0 : i32
    return %c0_i32, %c0_i32_0 : i32, i32
  }
  func.func @transform_3(%arg0: i32) -> (i32, i32) {
    %c0_i32 = arith.constant 0 : i32
    %c0_i32_0 = arith.constant 0 : i32
    %c0_i32_1 = arith.constant 0 : i32
    return %c0_i32, %c0_i32_0 : i32, i32
  }
  func.func @transform_4(%arg0: i32) -> (i32, i32) {
    %c0_i32 = arith.constant 0 : i32
    %c0_i32_0 = arith.constant 0 : i32
    %c0_i32_1 = arith.constant 0 : i32
    return %c0_i32, %c0_i32_0 : i32, i32
  }
  func.func @transform_5(%arg0: i32) -> (i32, i32) {
    %c0_i32 = arith.constant 0 : i32
    %c0_i32_0 = arith.constant 0 : i32
    %c0_i32_1 = arith.constant 0 : i32
    return %c0_i32, %c0_i32_0 : i32, i32
  }
  func.func @transform_6(%arg0: i32) -> (i32, i32) {
    %c0_i32 = arith.constant 0 : i32
    %c0_i32_0 = arith.constant 0 : i32
    %c0_i32_1 = arith.constant 0 : i32
    return %c0_i32, %c0_i32_0 : i32, i32
  }
  func.func @transform_7(%arg0: i32) -> (i32, i32) {
    %c0_i32 = arith.constant 0 : i32
    %c0_i32_0 = arith.constant 0 : i32
    %c0_i32_1 = arith.constant 0 : i32
    return %c0_i32, %c0_i32_0 : i32, i32
  }
  func.func @transform_8(%arg0: i32) -> (i32, i32) {
    %c0_i32 = arith.constant 0 : i32
    %c0_i32_0 = arith.constant 0 : i32
    %c0_i32_1 = arith.constant 0 : i32
    return %c0_i32, %c0_i32_0 : i32, i32
  }
  func.func @transform_9(%arg0: i32) -> (i32, i32) {
    %c0_i32 = arith.constant 0 : i32
    %c0_i32_0 = arith.constant 0 : i32
    %c0_i32_1 = arith.constant 0 : i32
    return %c0_i32, %c0_i32_0 : i32, i32
  }
  func.func @transform_10(%arg0: i32) -> (i32, i32, i32) {
    %c0_i32 = arith.constant 0 : i32
    %c0_i32_0 = arith.constant 0 : i32
    %c0_i32_1 = arith.constant 0 : i32
    return %arg0, %c0_i32, %c0_i32_0 : i32, i32, i32
  }
}

</mosaic_0001>

<llo_original>
// kernel: tpu_custom_call.1
$region0: #{tpu_custom_call.1}
  #allocation0 [shape = 'u32[]', space=smem, size = 0x4, offset = 0x4, fixed_abs, tag = 'smem constant byte address 0x4 - core index']
  #allocation1 [shape = 'u32[144,128]{1,0:T(1,128)}', space=vmem, size = 0x12000, scoped, tag = 'internal scratch']
  %s0 = inlined_call_operand.vmem [shape: f32[2,32,256], index: 0, kind: input, shape index: {}]
  %s1 = inlined_call_operand.hbm [shape: f32[2,32,256], index: 1, kind: input, shape index: {}]
  %s2 = inlined_call_operand.vmem [shape: f32[2,32], index: 2, kind: input, shape index: {}]
  %s3 = inlined_call_operand.vmem [shape: f32[2,1], index: 3, kind: input, shape index: {}]
  %s4 = inlined_call_operand.vmem [shape: f32[32,2], index: 4, kind: input, shape index: {}]
  %s5 = inlined_call_operand.vmem [shape: f32[32,1], index: 5, kind: input, shape index: {}]
  %s6 = inlined_call_operand.vmem [shape: f32[2,32], index: 6, kind: input, shape index: {}]
  %s7 = inlined_call_operand.vmem [shape: f32[2,1], index: 7, kind: input, shape index: {}]
  %s8 = inlined_call_operand.vmem [shape: f32[32,2], index: 8, kind: input, shape index: {}]
  %s9 = inlined_call_operand.vmem [shape: f32[32,1], index: 9, kind: input, shape index: {}]
  %s10 = inlined_call_operand.hbm [shape: f32[2,32,256], index: 10, kind: output, shape index: {}]
  %s11 = sld [smem:[#allocation0]]
  $region77: #{tpu_custom_call.1} parent=0
    _
  %s13 = ssub.s32 1, %s11
  %s14 = scalar_select 0, %s13, %s11
  $region1: #{tpu_custom_call.1} parent=0
    #allocation2 [shape = 'u8[65536]{0}', space=vmem, size = 0x10000, scoped, tag = 'input window, operand 1']
    #allocation3 [shape = 's32[2]{0}', space=sflag, size = 0x8, scoped, tag = 'scoped memory for tpu_custom_call.1']
    #allocation4 [shape = 's32[2]{0}', space=sflag, size = 0x8, scoped, tag = 'scoped memory for tpu_custom_call.1']
    #allocation5 [shape = 'u8[65536]{0}', space=vmem, size = 0x10000, scoped, tag = 'output window, operand 0']
    %15 = vsyncpa [#allocation3], 0
    %s16 = scalar_lea.sflag [#allocation3], 1
    %17 = vsyncpa %s16, 0
    %18 = vsyncpa [#allocation4], 0
    %s19 = scalar_lea.sflag [#allocation4], 1
    %20 = vsyncpa %s19, 0
    loop: start=0, step=1, limit=4
    $region2: #{tpu_custom_call.1} parent=1 // loop_pre_header
      _
    $region3: #{tpu_custom_call.1} parent=1 // loop_header
      %s22 = sphi 0, %s26
      %p23 = scmp.ge.s32.totalorder %s22, 4
      %s32 = sphi 0, %s34
      %s35 = sphi 0, %s32
      %s36 = sphi 0, %s35
      %s52 = sphi 0, %s36
      %s58 = sphi 0, %s60
      %s61 = sphi 0, %s58
      %s62 = sphi 0, %s61
      %s78 = sphi 0, %s62
      %s82 = sphi 0, %s82
      %s84 = sphi 0, %s82
      %s85 = sphi 0, %s84
      %s99 = sphi 0, %s85
      %s103 = sphi 0, %s103
      %s105 = sphi 0, %s103
      %s106 = sphi 0, %s105
      %s120 = sphi 0, %s106
      %s124 = sphi 0, %s124
      %s126 = sphi 0, %s124
      %s127 = sphi 0, %s126
      %s141 = sphi 0, %s127
      %s145 = sphi 0, %s145
      %s147 = sphi 0, %s145
      %s148 = sphi 0, %s147
      %s162 = sphi 0, %s148
      %s166 = sphi 0, %s166
      %s168 = sphi 0, %s166
      %s169 = sphi 0, %s168
      %s183 = sphi 0, %s169
      %s187 = sphi 0, %s187
      %s189 = sphi 0, %s187
      %s190 = sphi 0, %s189
      %s204 = sphi 0, %s190
      %s208 = sphi 0, %s208
      %s210 = sphi 0, %s208
      %s211 = sphi 0, %s210
      %s225 = sphi 0, %s211
      %s229 = sphi 0, %s229
      %s231 = sphi 0, %s229
      %s232 = sphi 0, %s231
      %s246 = sphi 0, %s232
      %s252 = sphi 0, %s254
      %s255 = sphi 0, %s252
      %s256 = sphi 0, %s255
      %s272 = sphi 0, %s256
    $region4: #{tpu_custom_call.1} parent=1 // loop_header_branch
      %25 = sbr.rel (%p23) target = $region8
    $region5: #{tpu_custom_call.1} parent=1 // loop_body
      %s27 = ssub.s32 %s22, 1
      %s28 = ssub.s32 %s22, 2
      %s29 = sadd.s32 %s22, 1
      %s30 = ssub.s32 %s22, %s29
      %p31 = scmp.eq.s32.totalorder %s30, 0
      %s33 = sadd.s32 %s32, 1
      %s34 = scalar_select %p31, %s32, %s33
      %p37 = pneg %p31
      %p38 = scmp.eq.s32.totalorder %s22, 1
      %p39 = por %p37, %p38
      %p40 = scmp.ne.s32.totalorder %s32, %s35
      %p41 = scmp.eq.s32.totalorder %s22, 0
      %p42 = por %p40, %p41
      %p43 = scmp.ne.s32.totalorder %s32, %s35
      %p44 = scmp.eq.s32.totalorder %s27, 1
      %p45 = por %p43, %p44
      %p46 = scmp.ne.s32.totalorder %s35, %s36
      %p47 = scmp.eq.s32.totalorder %s27, 0
      %p48 = por %p46, %p47
      %p49 = scmp.ne.s32.totalorder %s35, %s36
      %p50 = scmp.eq.s32.totalorder %s28, 1
      %p51 = por %p49, %p50
      %p53 = scmp.ne.s32.totalorder %s36, %s52
      %p54 = scmp.eq.s32.totalorder %s28, 0
      %p55 = por %p53, %p54
      %s56 = ssub.s32 %s22, %s29
      %p57 = scmp.eq.s32.totalorder %s56, 0
      %s59 = sadd.s32 %s58, 1
      %s60 = scalar_select %p57, %s58, %s59
      %p63 = pneg %p57
      %p64 = scmp.eq.s32.totalorder %s22, 1
      %p65 = por %p63, %p64
      %p66 = scmp.ne.s32.totalorder %s58, %s61
      %p67 = scmp.eq.s32.totalorder %s22, 0
      %p68 = por %p66, %p67
      %p69 = scmp.ne.s32.totalorder %s58, %s61
      %p70 = scmp.eq.s32.totalorder %s27, 1
      %p71 = por %p69, %p70
      %p72 = scmp.ne.s32.totalorder %s61, %s62
      %p73 = scmp.eq.s32.totalorder %s27, 0
      %p74 = por %p72, %p73
      %p75 = scmp.ne.s32.totalorder %s61, %s62
      %p76 = scmp.eq.s32.totalorder %s28, 1
      %p77 = por %p75, %p76
      %p79 = scmp.ne.s32.totalorder %s62, %s78
      %p80 = scmp.eq.s32.totalorder %s28, 0
      %p81 = por %p79, %p80
      %s83 = sadd.s32 %s82, 1
      %p86 = scmp.eq.s32.totalorder %s22, 1
      %p87 = scmp.ne.s32.totalorder %s82, %s84
      %p88 = scmp.eq.s32.totalorder %s22, 0
      %p89 = por %p87, %p88
      %p90 = scmp.ne.s32.totalorder %s82, %s84
      %p91 = scmp.eq.s32.totalorder %s27, 1
      %p92 = por %p90, %p91
      %p93 = scmp.ne.s32.totalorder %s84, %s85
      %p94 = scmp.eq.s32.totalorder %s27, 0
      %p95 = por %p93, %p94
      %p96 = scmp.ne.s32.totalorder %s84, %s85
      %p97 = scmp.eq.s32.totalorder %s28, 1
      %p98 = por %p96, %p97
      %p100 = scmp.ne.s32.totalorder %s85, %s99
      %p101 = scmp.eq.s32.totalorder %s28, 0
      %p102 = por %p100, %p101
      %s104 = sadd.s32 %s103, 1
      %p107 = scmp.eq.s32.totalorder %s22, 1
      %p108 = scmp.ne.s32.totalorder %s103, %s105
      %p109 = scmp.eq.s32.totalorder %s22, 0
      %p110 = por %p108, %p109
      %p111 = scmp.ne.s32.totalorder %s103, %s105
      %p112 = scmp.eq.s32.totalorder %s27, 1
      %p113 = por %p111, %p112
      %p114 = scmp.ne.s32.totalorder %s105, %s106
      %p115 = scmp.eq.s32.totalorder %s27, 0
      %p116 = por %p114, %p115
      %p117 = scmp.ne.s32.totalorder %s105, %s106
      %p118 = scmp.eq.s32.totalorder %s28, 1
      %p119 = por %p117, %p118
      %p121 = scmp.ne.s32.totalorder %s106, %s120
      %p122 = scmp.eq.s32.totalorder %s28, 0
      %p123 = por %p121, %p122
      %s125 = sadd.s32 %s124, 1
      %p128 = scmp.eq.s32.totalorder %s22, 1
      %p129 = scmp.ne.s32.totalorder %s124, %s126
      %p130 = scmp.eq.s32.totalorder %s22, 0
      %p131 = por %p129, %p130
      %p132 = scmp.ne.s32.totalorder %s124, %s126
      %p133 = scmp.eq.s32.totalorder %s27, 1
      %p134 = por %p132, %p133
      %p135 = scmp.ne.s32.totalorder %s126, %s127
      %p136 = scmp.eq.s32.totalorder %s27, 0
      %p137 = por %p135, %p136
      %p138 = scmp.ne.s32.totalorder %s126, %s127
      %p139 = scmp.eq.s32.totalorder %s28, 1
      %p140 = por %p138, %p139
      %p142 = scmp.ne.s32.totalorder %s127, %s141
      %p143 = scmp.eq.s32.totalorder %s28, 0
      %p144 = por %p142, %p143
      %s146 = sadd.s32 %s145, 1
      %p149 = scmp.eq.s32.totalorder %s22, 1
      %p150 = scmp.ne.s32.totalorder %s145, %s147
      %p151 = scmp.eq.s32.totalorder %s22, 0
      %p152 = por %p150, %p151
      %p153 = scmp.ne.s32.totalorder %s145, %s147
      %p154 = scmp.eq.s32.totalorder %s27, 1
      %p155 = por %p153, %p154
      %p156 = scmp.ne.s32.totalorder %s147, %s148
      %p157 = scmp.eq.s32.totalorder %s27, 0
      %p158 = por %p156, %p157
      %p159 = scmp.ne.s32.totalorder %s147, %s148
      %p160 = scmp.eq.s32.totalorder %s28, 1
      %p161 = por %p159, %p160
      %p163 = scmp.ne.s32.totalorder %s148, %s162
      %p164 = scmp.eq.s32.totalorder %s28, 0
      %p165 = por %p163, %p164
      %s167 = sadd.s32 %s166, 1
      %p170 = scmp.eq.s32.totalorder %s22, 1
      %p171 = scmp.ne.s32.totalorder %s166, %s168
      %p172 = scmp.eq.s32.totalorder %s22, 0
      %p173 = por %p171, %p172
      %p174 = scmp.ne.s32.totalorder %s166, %s168
      %p175 = scmp.eq.s32.totalorder %s27, 1
      %p176 = por %p174, %p175
      %p177 = scmp.ne.s32.totalorder %s168, %s169
      %p178 = scmp.eq.s32.totalorder %s27, 0
      %p179 = por %p177, %p178
      %p180 = scmp.ne.s32.totalorder %s168, %s169
      %p181 = scmp.eq.s32.totalorder %s28, 1
      %p182 = por %p180, %p181
      %p184 = scmp.ne.s32.totalorder %s169, %s183
      %p185 = scmp.eq.s32.totalorder %s28, 0
      %p186 = por %p184, %p185
      %s188 = sadd.s32 %s187, 1
      %p191 = scmp.eq.s32.totalorder %s22, 1
      %p192 = scmp.ne.s32.totalorder %s187, %s189
      %p193 = scmp.eq.s32.totalorder %s22, 0
      %p194 = por %p192, %p193
      %p195 = scmp.ne.s32.totalorder %s187, %s189
      %p196 = scmp.eq.s32.totalorder %s27, 1
      %p197 = por %p195, %p196
      %p198 = scmp.ne.s32.totalorder %s189, %s190
      %p199 = scmp.eq.s32.totalorder %s27, 0
      %p200 = por %p198, %p199
      %p201 = scmp.ne.s32.totalorder %s189, %s190
      %p202 = scmp.eq.s32.totalorder %s28, 1
      %p203 = por %p201, %p202
      %p205 = scmp.ne.s32.totalorder %s190, %s204
      %p206 = scmp.eq.s32.totalorder %s28, 0
      %p207 = por %p205, %p206
      %s209 = sadd.s32 %s208, 1
      %p212 = scmp.eq.s32.totalorder %s22, 1
      %p213 = scmp.ne.s32.totalorder %s208, %s210
      %p214 = scmp.eq.s32.totalorder %s22, 0
      %p215 = por %p213, %p214
      %p216 = scmp.ne.s32.totalorder %s208, %s210
      %p217 = scmp.eq.s32.totalorder %s27, 1
      %p218 = por %p216, %p217
      %p219 = scmp.ne.s32.totalorder %s210, %s211
      %p220 = scmp.eq.s32.totalorder %s27, 0
      %p221 = por %p219, %p220
      %p222 = scmp.ne.s32.totalorder %s210, %s211
      %p223 = scmp.eq.s32.totalorder %s28, 1
      %p224 = por %p222, %p223
      %p226 = scmp.ne.s32.totalorder %s211, %s225
      %p227 = scmp.eq.s32.totalorder %s28, 0
      %p228 = por %p226, %p227
      %s230 = sadd.s32 %s229, 1
      %p233 = scmp.eq.s32.totalorder %s22, 1
      %p234 = scmp.ne.s32.totalorder %s229, %s231
      %p235 = scmp.eq.s32.totalorder %s22, 0
      %p236 = por %p234, %p235
      %p237 = scmp.ne.s32.totalorder %s229, %s231
      %p238 = scmp.eq.s32.totalorder %s27, 1
      %p239 = por %p237, %p238
      %p240 = scmp.ne.s32.totalorder %s231, %s232
      %p241 = scmp.eq.s32.totalorder %s27, 0
      %p242 = por %p240, %p241
      %p243 = scmp.ne.s32.totalorder %s231, %s232
      %p244 = scmp.eq.s32.totalorder %s28, 1
      %p245 = por %p243, %p244
      %p247 = scmp.ne.s32.totalorder %s232, %s246
      %p248 = scmp.eq.s32.totalorder %s28, 0
      %p249 = por %p247, %p248
      %s250 = ssub.s32 %s22, %s29
      %p251 = scmp.eq.s32.totalorder %s250, 0
      %s253 = sadd.s32 %s252, 1
      %s254 = scalar_select %p251, %s252, %s253
      %p257 = pneg %p251
      %p258 = scmp.eq.s32.totalorder %s22, 1
      %p259 = por %p257, %p258
      %p260 = scmp.ne.s32.totalorder %s252, %s255
      %p261 = scmp.eq.s32.totalorder %s22, 0
      %p262 = por %p260, %p261
      %p263 = scmp.ne.s32.totalorder %s252, %s255
      %p264 = scmp.eq.s32.totalorder %s27, 1
      %p265 = por %p263, %p264
      %p266 = scmp.ne.s32.totalorder %s255, %s256
      %p267 = scmp.eq.s32.totalorder %s27, 0
      %p268 = por %p266, %p267
      %p269 = scmp.ne.s32.totalorder %s255, %s256
      %p270 = scmp.eq.s32.totalorder %s28, 1
      %p271 = por %p269, %p270
      %p273 = scmp.ne.s32.totalorder %s256, %s272
      %p274 = scmp.eq.s32.totalorder %s28, 0
      %p275 = por %p273, %p274
      %p276 = scmp.le.s32.totalorder 1, %s22
      %p277 = scmp.lt.s32.totalorder %s22, 3
      %p278 = pnand %p276, %p277
      %p279 = pneg %p278
      // Predicated region
      $region9: #{tpu_custom_call.1} parent=5 // pred_check
        _
      $region10: #{tpu_custom_call.1} parent=5 // pred_check_branch
        %281 = sbr.rel (%p278) target = $region12
      $region11: #{tpu_custom_call.1} parent=5 // pred_region
        %s282 = ssub.s32 %s22, 1
        // Predicated region
        $region13: #{tpu_custom_call.1} parent=11 // pred_check
          %p283 = pneg %p95
        $region14: #{tpu_custom_call.1} parent=11 // pred_check_branch
          %285 = sbr.rel (%p283) target = $region16
        $region15: #{tpu_custom_call.1} parent=11 // pred_region
          _
        $region16: #{tpu_custom_call.1} parent=11 // pred_fallthru
          _
        // Predicated region
        $region17: #{tpu_custom_call.1} parent=11 // pred_check
          %p286 = pneg %p116
        $region18: #{tpu_custom_call.1} parent=11 // pred_check_branch
          %288 = sbr.rel (%p286) target = $region20
        $region19: #{tpu_custom_call.1} parent=11 // pred_region
          _
        $region20: #{tpu_custom_call.1} parent=11 // pred_fallthru
          _
        // Predicated region
        $region21: #{tpu_custom_call.1} parent=11 // pred_check
          %p289 = pneg %p137
        $region22: #{tpu_custom_call.1} parent=11 // pred_check_branch
          %291 = sbr.rel (%p289) target = $region24
        $region23: #{tpu_custom_call.1} parent=11 // pred_region
          _
        $region24: #{tpu_custom_call.1} parent=11 // pred_fallthru
          _
        // Predicated region
        $region25: #{tpu_custom_call.1} parent=11 // pred_check
          %p292 = pneg %p158
        $region26: #{tpu_custom_call.1} parent=11 // pred_check_branch
          %294 = sbr.rel (%p292) target = $region28
        $region27: #{tpu_custom_call.1} parent=11 // pred_region
          _
        $region28: #{tpu_custom_call.1} parent=11 // pred_fallthru
          _
        // Predicated region
        $region29: #{tpu_custom_call.1} parent=11 // pred_check
          %p295 = pneg %p179
        $region30: #{tpu_custom_call.1} parent=11 // pred_check_branch
          %297 = sbr.rel (%p295) target = $region32
        $region31: #{tpu_custom_call.1} parent=11 // pred_region
          _
        $region32: #{tpu_custom_call.1} parent=11 // pred_fallthru
          _
        // Predicated region
        $region33: #{tpu_custom_call.1} parent=11 // pred_check
          %p298 = pneg %p200
        $region34: #{tpu_custom_call.1} parent=11 // pred_check_branch
          %300 = sbr.rel (%p298) target = $region36
        $region35: #{tpu_custom_call.1} parent=11 // pred_region
          _
        $region36: #{tpu_custom_call.1} parent=11 // pred_fallthru
          _
        // Predicated region
        $region37: #{tpu_custom_call.1} parent=11 // pred_check
          %p301 = pneg %p221
        $region38: #{tpu_custom_call.1} parent=11 // pred_check_branch
          %303 = sbr.rel (%p301) target = $region40
        $region39: #{tpu_custom_call.1} parent=11 // pred_region
          _
        $region40: #{tpu_custom_call.1} parent=11 // pred_fallthru
          _
        // Predicated region
        $region41: #{tpu_custom_call.1} parent=11 // pred_check
          %p304 = pneg %p242
        $region42: #{tpu_custom_call.1} parent=11 // pred_check_branch
          %306 = sbr.rel (%p304) target = $region44
        $region43: #{tpu_custom_call.1} parent=11 // pred_region
          _
        $region44: #{tpu_custom_call.1} parent=11 // pred_fallthru
          _
      $region12: #{tpu_custom_call.1} parent=5 // pred_fallthru
        _
      %p307 = scmp.lt.s32.totalorder %s22, 2
      // Predicated region
      $region45: #{tpu_custom_call.1} parent=5 // pred_check
        %p308 = pneg %p307
      $region46: #{tpu_custom_call.1} parent=5 // pred_check_branch
        %310 = sbr.rel (%p308) target = $region48
      $region47: #{tpu_custom_call.1} parent=5 // pred_region
        // Predicated region
        $region49: #{tpu_custom_call.1} parent=47 // pred_check
          %p311 = pneg %p42
        $region50: #{tpu_custom_call.1} parent=47 // pred_check_branch
          %313 = sbr.rel (%p311) target = $region52
        $region51: #{tpu_custom_call.1} parent=47 // pred_region
          %p314 = scmp.lt.s32.totalorder %s22, 1
          %s315 = scalar_select %p314, %s22, 1
          %s316 = smul.addr %s315, 8
          %s317 = smul.addr %s316, 8
          %s318 = scalar_lea.vmem %s0, %s317
        $region52: #{tpu_custom_call.1} parent=47 // pred_fallthru
          _
        // Predicated region
        $region53: #{tpu_custom_call.1} parent=47 // pred_check
          %p319 = pneg %p68
        $region54: #{tpu_custom_call.1} parent=47 // pred_check_branch
          %321 = sbr.rel (%p319) target = $region56
        $region55: #{tpu_custom_call.1} parent=47 // pred_region
          %s322 = sand.u32 %s58, 1
          %s323 = scalar_lea.sflag [#allocation3], %s322
          %s324 = sand.u32 %s58, 1
          %s325 = smul.addr %s324, 64
          %s326 = scalar_lea.vmem [#allocation2], %s325
          %s328 = ssub.s32 1024, 1024
          %329 = vsyncadd %s323, %s328
          %s330 = smul.addr %s22, 8
          %s331 = smul.addr %s330, 128
          %s332 = scalar_lea.hbm %s1, %s331
          %s333 = sshll.u32 %s326, 4
          %s334 = int_to_ptr.vmem [resolvable:$true] %s333
          %339 = dma.hbm_to_vmem [thread:$0]  %s332, 1024, %s334, %s323, 256, 256, 16
        $region56: #{tpu_custom_call.1} parent=47 // pred_fallthru
          _
      $region48: #{tpu_custom_call.1} parent=5 // pred_fallthru
        _
      %p340 = scmp.le.s32.totalorder 1, %s22
      %p341 = scmp.lt.s32.totalorder %s22, 3
      %p342 = pnand %p340, %p341
      %p343 = pneg %p342
      // Predicated region
      $region57: #{tpu_custom_call.1} parent=5 // pred_check
        _
      $region58: #{tpu_custom_call.1} parent=5 // pred_check_branch
        %345 = sbr.rel (%p342) target = $region60
      $region59: #{tpu_custom_call.1} parent=5 // pred_region
        %s346 = ssub.s32 %s22, 1
        %s347 = sand.u32 %s61, 1
        %s348 = scalar_lea.sflag [#allocation3], %s347
        %s349 = sand.u32 %s61, 1
        %s350 = smul.addr %s349, 64
        %s351 = scalar_lea.vmem [#allocation2], %s350
        // Predicated region
        $region61: #{tpu_custom_call.1} parent=59 // pred_check
          %p352 = pneg %p74
        $region62: #{tpu_custom_call.1} parent=59 // pred_check_branch
          %354 = sbr.rel (%p352) target = $region64
        $region63: #{tpu_custom_call.1} parent=59 // pred_region
          %355 = dma.done %s348, 1024
        $region64: #{tpu_custom_call.1} parent=59 // pred_fallthru
          _
        %p356 = scmp.lt.s32.totalorder %s27, 1
        %s357 = scalar_select %p356, %s27, 1
        %s358 = smul.addr %s357, 8
        %s359 = smul.addr %s358, 8
        %s360 = scalar_lea.vmem %s0, %s359
        %p361 = pneg %p48
        %p362 = pneg %p45
        %s363 = sand.u32 %s61, 1
        %s364 = scalar_lea.sflag [#allocation3], %s363
        %s365 = sand.u32 %s61, 1
        %s366 = smul.addr %s365, 64
        %s367 = scalar_lea.vmem [#allocation2], %s366
        %p368 = pneg %p74
        %p369 = pneg %p71
        %p370 = pneg %p95
        %p371 = pneg %p92
        %p372 = pneg %p116
        %p373 = pneg %p113
        %p374 = pneg %p137
        %p375 = pneg %p134
        %p376 = pneg %p158
        %p377 = pneg %p155
        %p378 = pneg %p179
        %p379 = pneg %p176
        %p380 = pneg %p200
        %p381 = pneg %p197
        %p382 = pneg %p221
        %p383 = pneg %p218
        %p384 = pneg %p242
        %p385 = pneg %p239
        %p386 = pneg %p268
        %p387 = pneg %p265
        %s388 = sand.u32 %s255, 1
        %s389 = scalar_lea.sflag [#allocation4], %s388
        %s390 = sand.u32 %s255, 1
        %s391 = smul.addr %s390, 64
        %s392 = scalar_lea.vmem [#allocation5], %s391
        %p393 = scmp.lt.s32.totalorder %s27, 1
        %s394 = scalar_select %p393, %s27, 1
        %s395 = smul.addr %s394, 8
        %s396 = smul.addr %s395, 8
        %s397 = scalar_lea.vmem %s0, %s396
        %v398 = vld [vmem:[%s397] sm:$0xff]
        %v399 = vld [vmem:[%s397 + $0x8] sm:$0xff]
        %v400 = vld [vmem:[%s397 + $0x10] sm:$0xff]
        %v401 = vld [vmem:[%s397 + $0x18] sm:$0xff]
        %v402 = vld [vmem:[%s397 + $0x20] sm:$0xff]
        %v403 = vld [vmem:[%s397 + $0x28] sm:$0xff]
        %v404 = vld [vmem:[%s397 + $0x30] sm:$0xff]
        %v405 = vld [vmem:[%s397 + $0x38] sm:$0xff]
        %v406 = vld [vmem:[%s351] sm:$0xff]
        %v407 = vld [vmem:[%s351 + $0x8] sm:$0xff]
        %v408 = vld [vmem:[%s351 + $0x10] sm:$0xff]
        %v409 = vld [vmem:[%s351 + $0x18] sm:$0xff]
        %v410 = vld [vmem:[%s351 + $0x20] sm:$0xff]
        %v411 = vld [vmem:[%s351 + $0x28] sm:$0xff]
        %v412 = vld [vmem:[%s351 + $0x30] sm:$0xff]
        %v413 = vld [vmem:[%s351 + $0x38] sm:$0xff]
        %v414 = vadd.f32 %v398, %v399
        %415 = vadd.xlane.f32.xlu0 %v414
        %v416 = vpop.xlane.xlu0 %415
        %v417 = vadd.f32 %v400, %v401
        %418 = vadd.xlane.f32.xlu0 %v417
        %v419 = vpop.xlane.xlu0 %418
        %v420 = vadd.f32 %v402, %v403
        %421 = vadd.xlane.f32.xlu0 %v420
        %v422 = vpop.xlane.xlu0 %421
        %v423 = vadd.f32 %v404, %v405
        %424 = vadd.xlane.f32.xlu0 %v423
        %v425 = vpop.xlane.xlu0 %424
        %v426 = vmul.f32 %v416, 0.00390625
        %v427 = vmul.f32 %v419, 0.00390625
        %v428 = vmul.f32 %v422, 0.00390625
        %v429 = vmul.f32 %v425, 0.00390625
        %v430 = vadd.f32 %v406, %v407
        %431 = vadd.xlane.f32.xlu0 %v430
        %v432 = vpop.xlane.xlu0 %431
        %v433 = vadd.f32 %v408, %v409
        %434 = vadd.xlane.f32.xlu0 %v433
        %v435 = vpop.xlane.xlu0 %434
        %v436 = vadd.f32 %v410, %v411
        %437 = vadd.xlane.f32.xlu0 %v436
        %v438 = vpop.xlane.xlu0 %437
        %v439 = vadd.f32 %v412, %v413
        %440 = vadd.xlane.f32.xlu0 %v439
        %v441 = vpop.xlane.xlu0 %440
        %v442 = vmul.f32 %v432, 0.00390625
        %v443 = vmul.f32 %v435, 0.00390625
        %v444 = vmul.f32 %v438, 0.00390625
        %v445 = vmul.f32 %v441, 0.00390625
        %v446 = vld [vmem:[%s2] sm:$0x3]
        %v447 = vld [vmem:[%s3] sm:$0x3]
        %v448 = vld [vmem:[%s4] sm:$0xff]
        %v449 = vld [vmem:[%s4 + $0x8] sm:$0xff]
        %v450 = vld [vmem:[%s4 + $0x10] sm:$0xff]
        %v451 = vld [vmem:[%s4 + $0x18] sm:$0xff]
        %v452 = vld [vmem:[%s5] sm:$0xff]
        %v453 = vld [vmem:[%s5 + $0x8] sm:$0xff]
        %v454 = vld [vmem:[%s5 + $0x10] sm:$0xff]
        %v455 = vld [vmem:[%s5 + $0x18] sm:$0xff]
        %vm456 = vcmask 261120
        %v458 = vsel %vm456, %v446, 0
        %460 = vmatprep.subr.mxu0 0.0
        %461 = vmatpush1.msra.mxu0 0.0
        %462 = vmatprep.subr.mxu0 0.0
        %463 = vmatpush1.msra.mxu0 0.0
        %464 = vmatprep.subr.mxu0 0.0
        %465 = vmatpush1.msra.mxu0 0.0
        %466 = vmatprep.subr.mxu0 0.0
        %467 = vmatpush1.msra.mxu0 0.0
        %468 = vmatprep.subr.mxu0 0.0
        %469 = vmatpush1.msra.mxu0 0.0
        %470 = vmatprep.subr.mxu0 0.0
        %471 = vmatpush1.msra.mxu0 0.0
        %472 = vmatprep.subr.mxu0 0.0
        %473 = vmatpush1.msra.mxu0 0.0
        %474 = vmatprep.subr.mxu0 0.0
        %475 = vmatpush1.msra.mxu0 0.0
        %476 = vmatprep.subr.mxu0 0.0
        %477 = vmatpush1.msra.mxu0 0.0
        %478 = vmatprep.subr.mxu0 0.0
        %479 = vmatpush1.msra.mxu0 0.0
        %480 = vmatprep.subr.mxu0 0.0
        %481 = vmatpush1.msra.mxu0 0.0
        %482 = vmatprep.subr.mxu0 0.0
        %483 = vmatpush1.msra.mxu0 0.0
        %484 = vmatprep.subr.mxu0 0.0
        %485 = vmatpush1.msra.mxu0 %v429
        %486 = vmatprep.subr.mxu0 0.0
        %487 = vmatpush1.msra.mxu0 %v428
        %488 = vmatprep.subr.mxu0 0.0
        %489 = vmatpush1.msra.mxu0 %v427
        %490 = vmatprep.subr.mxu0 0.0
        %491 = vmatpush1.msra.mxu0 %v426
        %492 = vmatprep.subr.mxu0 0.0
        %493 = vmatpush2.msra.mxu0 0.0
        %494 = vmatprep.subr.mxu0 0.0
        %495 = vmatpush2.msra.mxu0 0.0
        %496 = vmatprep.subr.mxu0 0.0
        %497 = vmatpush2.msra.mxu0 0.0
        %498 = vmatprep.subr.mxu0 0.0
        %499 = vmatpush2.msra.mxu0 0.0
        %500 = vmatprep.subr.mxu0 0.0
        %501 = vmatpush2.msra.mxu0 0.0
        %502 = vmatprep.subr.mxu0 0.0
        %503 = vmatpush2.msra.mxu0 0.0
        %504 = vmatprep.subr.mxu0 0.0
        %505 = vmatpush2.msra.mxu0 0.0
        %506 = vmatprep.subr.mxu0 0.0
        %507 = vmatpush2.msra.mxu0 0.0
        %508 = vmatprep.subr.mxu0 0.0
        %509 = vmatpush2.msra.mxu0 0.0
        %510 = vmatprep.subr.mxu0 0.0
        %511 = vmatpush2.msra.mxu0 0.0
        %512 = vmatprep.subr.mxu0 0.0
        %513 = vmatpush2.msra.mxu0 0.0
        %514 = vmatprep.subr.mxu0 0.0
        %515 = vmatpush2.msra.mxu0 0.0
        %516 = vmatprep.subr.mxu0 0.0
        %517 = vmatpush2.msra.mxu0 0.0
        %518 = vmatprep.subr.mxu0 0.0
        %519 = vmatpush2.msra.mxu0 0.0
        %520 = vmatprep.subr.mxu0 0.0
        %521 = vmatpush2.msra.mxu0 0.0
        %522 = vmatprep.subr.mxu0 0.0
        %523 = vmatpush2.msra.mxu0 0.0
        %524 = vmatprep.mubr.f32.mxu0 0.0
        %525 = vmatmul.mubr.f32.gmra.mxu0 %v458
        %v526 = vpop.f32.mrf.mxu0
        %v527 = vadd.f32 %v447, %v526
        %v528 = vpop.f32.mrf.mxu0
        %529 = vdwg.mxu0
        %v530 = vmax.f32 %v527, 0.0
        %vm531 = vcmask 15360
        %v533 = vsel %vm531, %v448, 0
        %v536 = vsel %vm531, %v449, 0
        %v539 = vsel %vm531, %v450, 0
        %v542 = vsel %vm531, %v451, 0
        %vm544 = vcmask 1041408
        %v546 = vsel %vm544, %v530, 0
        %548 = vmatprep.subr.mxu0 0.0
        %549 = vmatpush1.msra.mxu0 0.0
        %550 = vmatprep.subr.mxu0 0.0
        %551 = vmatpush1.msra.mxu0 0.0
        %552 = vmatprep.subr.mxu0 0.0
        %553 = vmatpush1.msra.mxu0 0.0
        %554 = vmatprep.subr.mxu0 0.0
        %555 = vmatpush1.msra.mxu0 0.0
        %556 = vmatprep.subr.mxu0 0.0
        %557 = vmatpush1.msra.mxu0 0.0
        %558 = vmatprep.subr.mxu0 0.0
        %559 = vmatpush1.msra.mxu0 0.0
        %560 = vmatprep.subr.mxu0 0.0
        %561 = vmatpush1.msra.mxu0 0.0
        %562 = vmatprep.subr.mxu0 0.0
        %563 = vmatpush1.msra.mxu0 0.0
        %564 = vmatprep.subr.mxu0 0.0
        %565 = vmatpush1.msra.mxu0 0.0
        %566 = vmatprep.subr.mxu0 0.0
        %567 = vmatpush1.msra.mxu0 0.0
        %568 = vmatprep.subr.mxu0 0.0
        %569 = vmatpush1.msra.mxu0 0.0
        %570 = vmatprep.subr.mxu0 0.0
        %571 = vmatpush1.msra.mxu0 0.0
        %572 = vmatprep.subr.mxu0 0.0
        %573 = vmatpush1.msra.mxu0 0.0
        %574 = vmatprep.subr.mxu0 0.0
        %575 = vmatpush1.msra.mxu0 0.0
        %576 = vmatprep.subr.mxu0 0.0
        %577 = vmatpush1.msra.mxu0 0.0
        %578 = vmatprep.subr.mxu0 0.0
        %579 = vmatpush1.msra.mxu0 %v546
        %580 = vmatprep.subr.mxu0 0.0
        %581 = vmatpush2.msra.mxu0 0.0
        %582 = vmatprep.subr.mxu0 0.0
        %583 = vmatpush2.msra.mxu0 0.0
        %584 = vmatprep.subr.mxu0 0.0
        %585 = vmatpush2.msra.mxu0 0.0
        %586 = vmatprep.subr.mxu0 0.0
        %587 = vmatpush2.msra.mxu0 0.0
        %588 = vmatprep.subr.mxu0 0.0
        %589 = vmatpush2.msra.mxu0 0.0
        %590 = vmatprep.subr.mxu0 0.0
        %591 = vmatpush2.msra.mxu0 0.0
        %592 = vmatprep.subr.mxu0 0.0
        %593 = vmatpush2.msra.mxu0 0.0
        %594 = vmatprep.subr.mxu0 0.0
        %595 = vmatpush2.msra.mxu0 0.0
        %596 = vmatprep.subr.mxu0 0.0
        %597 = vmatpush2.msra.mxu0 0.0
        %598 = vmatprep.subr.mxu0 0.0
        %599 = vmatpush2.msra.mxu0 0.0
        %600 = vmatprep.subr.mxu0 0.0
        %601 = vmatpush2.msra.mxu0 0.0
        %602 = vmatprep.subr.mxu0 0.0
        %603 = vmatpush2.msra.mxu0 0.0
        %604 = vmatprep.subr.mxu0 0.0
        %605 = vmatpush2.msra.mxu0 0.0
        %606 = vmatprep.subr.mxu0 0.0
        %607 = vmatpush2.msra.mxu0 0.0
        %608 = vmatprep.subr.mxu0 0.0
        %609 = vmatpush2.msra.mxu0 0.0
        %610 = vmatprep.subr.mxu0 0.0
        %611 = vmatpush2.msra.mxu0 0.0
        %612 = vmatprep.mubr.f32.mxu0 0.0
        %613 = vmatmul.mubr.f32.gmra.mxu0 %v533
        %v614 = vpop.f32.mrf.mxu0
        %v615 = vadd.f32 %v452, %v614
        %v616 = vpop.f32.mrf.mxu0
        %617 = vmatprep.mubr.f32.mxu0 0.0
        %618 = vmatmul.mubr.f32.gmra.mxu0 %v536
        %v619 = vpop.f32.mrf.mxu0
        %v620 = vadd.f32 %v453, %v619
        %v621 = vpop.f32.mrf.mxu0
        %622 = vmatprep.mubr.f32.mxu0 0.0
        %623 = vmatmul.mubr.f32.gmra.mxu0 %v539
        %v624 = vpop.f32.mrf.mxu0
        %v625 = vadd.f32 %v454, %v624
        %v626 = vpop.f32.mrf.mxu0
        %627 = vmatprep.mubr.f32.mxu0 0.0
        %628 = vmatmul.mubr.f32.gmra.mxu0 %v542
        %v629 = vpop.f32.mrf.mxu0
        %v630 = vadd.f32 %v455, %v629
        %v631 = vpop.f32.mrf.mxu0
        %632 = vdwg.mxu0
        %v633 = vsub.f32 0.0, %v615
        %v634 = vsub.f32 0.0, %v620
        %v635 = vsub.f32 0.0, %v625
        %v636 = vsub.f32 0.0, %v630
        %v637 = vmul.f32 %v633, 1.442695
        %v638 = vpow.pop %v637
        %v639 = vmul.f32 %v634, 1.442695
        %v640 = vpow.pop %v639
        %v641 = vmul.f32 %v635, 1.442695
        %v642 = vpow.pop %v641
        %v643 = vmul.f32 %v636, 1.442695
        %v644 = vpow.pop %v643
        %v645 = vadd.f32 %v638, 1.0
        %v646 = vadd.f32 %v640, 1.0
        %v647 = vadd.f32 %v642, 1.0
        %v648 = vadd.f32 %v644, 1.0
        %v649 = vrcp.pop %v645
        %v650 = vmul.f32 1.0, %v649
        %v651 = vrcp.pop %v646
        %v652 = vmul.f32 1.0, %v651
        %v653 = vrcp.pop %v647
        %v654 = vmul.f32 1.0, %v653
        %v655 = vrcp.pop %v648
        %v656 = vmul.f32 1.0, %v655
        %v657 = vld [vmem:[%s6] sm:$0x3]
        %v658 = vld [vmem:[%s7] sm:$0x3]
        %v659 = vld [vmem:[%s8] sm:$0xff]
        %v660 = vld [vmem:[%s8 + $0x8] sm:$0xff]
        %v661 = vld [vmem:[%s8 + $0x10] sm:$0xff]
        %v662 = vld [vmem:[%s8 + $0x18] sm:$0xff]
        %v663 = vld [vmem:[%s9] sm:$0xff]
        %v664 = vld [vmem:[%s9 + $0x8] sm:$0xff]
        %v665 = vld [vmem:[%s9 + $0x10] sm:$0xff]
        %v666 = vld [vmem:[%s9 + $0x18] sm:$0xff]
        %v668 = vsel %vm456, %v657, 0
        %670 = vmatprep.subr.mxu0 0.0
        %671 = vmatpush1.msra.mxu0 0.0
        %672 = vmatprep.subr.mxu0 0.0
        %673 = vmatpush1.msra.mxu0 0.0
        %674 = vmatprep.subr.mxu0 0.0
        %675 = vmatpush1.msra.mxu0 0.0
        %676 = vmatprep.subr.mxu0 0.0
        %677 = vmatpush1.msra.mxu0 0.0
        %678 = vmatprep.subr.mxu0 0.0
        %679 = vmatpush1.msra.mxu0 0.0
        %680 = vmatprep.subr.mxu0 0.0
        %681 = vmatpush1.msra.mxu0 0.0
        %682 = vmatprep.subr.mxu0 0.0
        %683 = vmatpush1.msra.mxu0 0.0
        %684 = vmatprep.subr.mxu0 0.0
        %685 = vmatpush1.msra.mxu0 0.0
        %686 = vmatprep.subr.mxu0 0.0
        %687 = vmatpush1.msra.mxu0 0.0
        %688 = vmatprep.subr.mxu0 0.0
        %689 = vmatpush1.msra.mxu0 0.0
        %690 = vmatprep.subr.mxu0 0.0
        %691 = vmatpush1.msra.mxu0 0.0
        %692 = vmatprep.subr.mxu0 0.0
        %693 = vmatpush1.msra.mxu0 0.0
        %694 = vmatprep.subr.mxu0 0.0
        %695 = vmatpush1.msra.mxu0 %v445
        %696 = vmatprep.subr.mxu0 0.0
        %697 = vmatpush1.msra.mxu0 %v444
        %698 = vmatprep.subr.mxu0 0.0
        %699 = vmatpush1.msra.mxu0 %v443
        %700 = vmatprep.subr.mxu0 0.0
        %701 = vmatpush1.msra.mxu0 %v442
        %702 = vmatprep.subr.mxu0 0.0
        %703 = vmatpush2.msra.mxu0 0.0
        %704 = vmatprep.subr.mxu0 0.0
        %705 = vmatpush2.msra.mxu0 0.0
        %706 = vmatprep.subr.mxu0 0.0
        %707 = vmatpush2.msra.mxu0 0.0
        %708 = vmatprep.subr.mxu0 0.0
        %709 = vmatpush2.msra.mxu0 0.0
        %710 = vmatprep.subr.mxu0 0.0
        %711 = vmatpush2.msra.mxu0 0.0
        %712 = vmatprep.subr.mxu0 0.0
        %713 = vmatpush2.msra.mxu0 0.0
        %714 = vmatprep.subr.mxu0 0.0
        %715 = vmatpush2.msra.mxu0 0.0
        %716 = vmatprep.subr.mxu0 0.0
        %717 = vmatpush2.msra.mxu0 0.0
        %718 = vmatprep.subr.mxu0 0.0
        %719 = vmatpush2.msra.mxu0 0.0
        %720 = vmatprep.subr.mxu0 0.0
        %721 = vmatpush2.msra.mxu0 0.0
        %722 = vmatprep.subr.mxu0 0.0
        %723 = vmatpush2.msra.mxu0 0.0
        %724 = vmatprep.subr.mxu0 0.0
        %725 = vmatpush2.msra.mxu0 0.0
        %726 = vmatprep.subr.mxu0 0.0
        %727 = vmatpush2.msra.mxu0 0.0
        %728 = vmatprep.subr.mxu0 0.0
        %729 = vmatpush2.msra.mxu0 0.0
        %730 = vmatprep.subr.mxu0 0.0
        %731 = vmatpush2.msra.mxu0 0.0
        %732 = vmatprep.subr.mxu0 0.0
        %733 = vmatpush2.msra.mxu0 0.0
        %734 = vmatprep.mubr.f32.mxu0 0.0
        %735 = vmatmul.mubr.f32.gmra.mxu0 %v668
        %v736 = vpop.f32.mrf.mxu0
        %v737 = vadd.f32 %v658, %v736
        %v738 = vpop.f32.mrf.mxu0
        %739 = vdwg.mxu0
        %v740 = vmax.f32 %v737, 0.0
        %v742 = vsel %vm531, %v659, 0
        %v745 = vsel %vm531, %v660, 0
        %v748 = vsel %vm531, %v661, 0
        %v751 = vsel %vm531, %v662, 0
        %v754 = vsel %vm544, %v740, 0
        %756 = vmatprep.subr.mxu0 0.0
        %757 = vmatpush1.msra.mxu0 0.0
        %758 = vmatprep.subr.mxu0 0.0
        %759 = vmatpush1.msra.mxu0 0.0
        %760 = vmatprep.subr.mxu0 0.0
        %761 = vmatpush1.msra.mxu0 0.0
        %762 = vmatprep.subr.mxu0 0.0
        %763 = vmatpush1.msra.mxu0 0.0
        %764 = vmatprep.subr.mxu0 0.0
        %765 = vmatpush1.msra.mxu0 0.0
        %766 = vmatprep.subr.mxu0 0.0
        %767 = vmatpush1.msra.mxu0 0.0
        %768 = vmatprep.subr.mxu0 0.0
        %769 = vmatpush1.msra.mxu0 0.0
        %770 = vmatprep.subr.mxu0 0.0
        %771 = vmatpush1.msra.mxu0 0.0
        %772 = vmatprep.subr.mxu0 0.0
        %773 = vmatpush1.msra.mxu0 0.0
        %774 = vmatprep.subr.mxu0 0.0
        %775 = vmatpush1.msra.mxu0 0.0
        %776 = vmatprep.subr.mxu0 0.0
        %777 = vmatpush1.msra.mxu0 0.0
        %778 = vmatprep.subr.mxu0 0.0
        %779 = vmatpush1.msra.mxu0 0.0
        %780 = vmatprep.subr.mxu0 0.0
        %781 = vmatpush1.msra.mxu0 0.0
        %782 = vmatprep.subr.mxu0 0.0
        %783 = vmatpush1.msra.mxu0 0.0
        %784 = vmatprep.subr.mxu0 0.0
        %785 = vmatpush1.msra.mxu0 0.0
        %786 = vmatprep.subr.mxu0 0.0
        %787 = vmatpush1.msra.mxu0 %v754
        %788 = vmatprep.subr.mxu0 0.0
        %789 = vmatpush2.msra.mxu0 0.0
        %790 = vmatprep.subr.mxu0 0.0
        %791 = vmatpush2.msra.mxu0 0.0
        %792 = vmatprep.subr.mxu0 0.0
        %793 = vmatpush2.msra.mxu0 0.0
        %794 = vmatprep.subr.mxu0 0.0
        %795 = vmatpush2.msra.mxu0 0.0
        %796 = vmatprep.subr.mxu0 0.0
        %797 = vmatpush2.msra.mxu0 0.0
        %798 = vmatprep.subr.mxu0 0.0
        %799 = vmatpush2.msra.mxu0 0.0
        %800 = vmatprep.subr.mxu0 0.0
        %801 = vmatpush2.msra.mxu0 0.0
        %802 = vmatprep.subr.mxu0 0.0
        %803 = vmatpush2.msra.mxu0 0.0
        %804 = vmatprep.subr.mxu0 0.0
        %805 = vmatpush2.msra.mxu0 0.0
        %806 = vmatprep.subr.mxu0 0.0
        %807 = vmatpush2.msra.mxu0 0.0
        %808 = vmatprep.subr.mxu0 0.0
        %809 = vmatpush2.msra.mxu0 0.0
        %810 = vmatprep.subr.mxu0 0.0
        %811 = vmatpush2.msra.mxu0 0.0
        %812 = vmatprep.subr.mxu0 0.0
        %813 = vmatpush2.msra.mxu0 0.0
        %814 = vmatprep.subr.mxu0 0.0
        %815 = vmatpush2.msra.mxu0 0.0
        %816 = vmatprep.subr.mxu0 0.0
        %817 = vmatpush2.msra.mxu0 0.0
        %818 = vmatprep.subr.mxu0 0.0
        %819 = vmatpush2.msra.mxu0 0.0
        %820 = vmatprep.mubr.f32.mxu0 0.0
        %821 = vmatmul.mubr.f32.gmra.mxu0 %v742
        %v822 = vpop.f32.mrf.mxu0
        %v823 = vadd.f32 %v663, %v822
        %v824 = vpop.f32.mrf.mxu0
        %825 = vmatprep.mubr.f32.mxu0 0.0
        %826 = vmatmul.mubr.f32.gmra.mxu0 %v745
        %v827 = vpop.f32.mrf.mxu0
        %v828 = vadd.f32 %v664, %v827
        %v829 = vpop.f32.mrf.mxu0
        %830 = vmatprep.mubr.f32.mxu0 0.0
        %831 = vmatmul.mubr.f32.gmra.mxu0 %v748
        %v832 = vpop.f32.mrf.mxu0
        %v833 = vadd.f32 %v665, %v832
        %v834 = vpop.f32.mrf.mxu0
        %835 = vmatprep.mubr.f32.mxu0 0.0
        %836 = vmatmul.mubr.f32.gmra.mxu0 %v751
        %v837 = vpop.f32.mrf.mxu0
        %v838 = vadd.f32 %v666, %v837
        %v839 = vpop.f32.mrf.mxu0
        %840 = vdwg.mxu0
        %v841 = vsub.f32 0.0, %v823
        %v842 = vsub.f32 0.0, %v828
        %v843 = vsub.f32 0.0, %v833
        %v844 = vsub.f32 0.0, %v838
        %v845 = vmul.f32 %v841, 1.442695
        %v846 = vpow.pop %v845
        %v847 = vmul.f32 %v842, 1.442695
        %v848 = vpow.pop %v847
        %v849 = vmul.f32 %v843, 1.442695
        %v850 = vpow.pop %v849
        %v851 = vmul.f32 %v844, 1.442695
        %v852 = vpow.pop %v851
        %v853 = vadd.f32 %v846, 1.0
        %v854 = vadd.f32 %v848, 1.0
        %v855 = vadd.f32 %v850, 1.0
        %v856 = vadd.f32 %v852, 1.0
        %v857 = vrcp.pop %v853
        %v858 = vmul.f32 1.0, %v857
        %v859 = vrcp.pop %v854
        %v860 = vmul.f32 1.0, %v859
        %v861 = vrcp.pop %v855
        %v862 = vmul.f32 1.0, %v861
        %v863 = vrcp.pop %v856
        %v864 = vmul.f32 1.0, %v863
        %866 = vset.pattern.permute.xlu0 0
        %867 = vperm.xlu0 %866, %v650
        %v868 = vpop.permute.xlu0 %867
        %871 = vset.pattern.permute.xlu0 0
        %872 = vperm.xlu0 %871, %v652
        %v873 = vpop.permute.xlu0 %872
        %876 = vset.pattern.permute.xlu0 0
        %877 = vperm.xlu0 %876, %v654
        %v878 = vpop.permute.xlu0 %877
        %881 = vset.pattern.permute.xlu0 0
        %882 = vperm.xlu0 %881, %v656
        %v883 = vpop.permute.xlu0 %882
        %v885 = vmul.f32 %v398, %v868
        %v886 = vmul.f32 %v399, %v868
        %v887 = vmul.f32 %v400, %v873
        %v888 = vmul.f32 %v401, %v873
        %v889 = vmul.f32 %v402, %v878
        %v890 = vmul.f32 %v403, %v878
        %v891 = vmul.f32 %v404, %v883
        %v892 = vmul.f32 %v405, %v883
        %894 = vset.pattern.permute.xlu0 0
        %895 = vperm.xlu0 %894, %v858
        %v896 = vpop.permute.xlu0 %895
        %899 = vset.pattern.permute.xlu0 0
        %900 = vperm.xlu0 %899, %v860
        %v901 = vpop.permute.xlu0 %900
        %904 = vset.pattern.permute.xlu0 0
        %905 = vperm.xlu0 %904, %v862
        %v906 = vpop.permute.xlu0 %905
        %909 = vset.pattern.permute.xlu0 0
        %910 = vperm.xlu0 %909, %v864
        %v911 = vpop.permute.xlu0 %910
        %v913 = vmul.f32 %v406, %v896
        %v914 = vmul.f32 %v407, %v896
        %v915 = vmul.f32 %v408, %v901
        %v916 = vmul.f32 %v409, %v901
        %v917 = vmul.f32 %v410, %v906
        %v918 = vmul.f32 %v411, %v906
        %v919 = vmul.f32 %v412, %v911
        %v920 = vmul.f32 %v413, %v911
        %v921 = vadd.f32 %v885, %v913
        %v922 = vadd.f32 %v886, %v914
        %v923 = vadd.f32 %v887, %v915
        %v924 = vadd.f32 %v888, %v916
        %v925 = vadd.f32 %v889, %v917
        %v926 = vadd.f32 %v890, %v918
        %v927 = vadd.f32 %v891, %v919
        %v928 = vadd.f32 %v892, %v920
        %929 = vst [vmem:[%s392] sm:$0xff] %v921
        %930 = vst [vmem:[%s392 + $0x8] sm:$0xff] %v922
        %931 = vst [vmem:[%s392 + $0x10] sm:$0xff] %v923
        %932 = vst [vmem:[%s392 + $0x18] sm:$0xff] %v924
        %933 = vst [vmem:[%s392 + $0x20] sm:$0xff] %v925
        %934 = vst [vmem:[%s392 + $0x28] sm:$0xff] %v926
        %935 = vst [vmem:[%s392 + $0x30] sm:$0xff] %v927
        %936 = vst [vmem:[%s392 + $0x38] sm:$0xff] %v928
        %s937 = sand.u32 %s255, 1
        %s938 = scalar_lea.sflag [#allocation4], %s937
        %s939 = sand.u32 %s255, 1
        %s940 = smul.addr %s939, 64
        %s941 = scalar_lea.vmem [#allocation5], %s940
        // Predicated region
        $region65: #{tpu_custom_call.1} parent=59 // pred_check
          %p942 = pneg %p265
        $region66: #{tpu_custom_call.1} parent=59 // pred_check_branch
          %944 = sbr.rel (%p942) target = $region68
        $region67: #{tpu_custom_call.1} parent=59 // pred_region
          %s946 = ssub.s32 1024, 1024
          %947 = vsyncadd %s938, %s946
          %s948 = smul.addr %s27, 8
          %s949 = smul.addr %s948, 128
          %s950 = scalar_lea.hbm %s10, %s949
          %s951 = sshll.u32 %s941, 4
          %s952 = int_to_ptr.vmem [resolvable:$true] %s951
          %957 = dma.vmem_to_hbm [thread:$0]  %s952, 1024, %s950, %s938, 256, 256, 16
        $region68: #{tpu_custom_call.1} parent=59 // pred_fallthru
          _
      $region60: #{tpu_custom_call.1} parent=5 // pred_fallthru
        _
      %p958 = scmp.le.s32.totalorder 2, %s22
      // Predicated region
      $region69: #{tpu_custom_call.1} parent=5 // pred_check
        %p959 = pneg %p958
      $region70: #{tpu_custom_call.1} parent=5 // pred_check_branch
        %961 = sbr.rel (%p959) target = $region72
      $region71: #{tpu_custom_call.1} parent=5 // pred_region
        %s962 = ssub.s32 %s22, 2
        // Predicated region
        $region73: #{tpu_custom_call.1} parent=71 // pred_check
          %p963 = pneg %p271
        $region74: #{tpu_custom_call.1} parent=71 // pred_check_branch
          %965 = sbr.rel (%p963) target = $region76
        $region75: #{tpu_custom_call.1} parent=71 // pred_region
          %s966 = sand.u32 %s256, 1
          %s967 = scalar_lea.sflag [#allocation4], %s966
          %s968 = sand.u32 %s256, 1
          %s969 = smul.addr %s968, 64
          %s970 = scalar_lea.vmem [#allocation5], %s969
          %971 = dma.done %s967, 1024
        $region76: #{tpu_custom_call.1} parent=71 // pred_fallthru
          _
      $region72: #{tpu_custom_call.1} parent=5 // pred_fallthru
        _
    $region6: #{tpu_custom_call.1} parent=1 // loop_footer
      %s26 = sadd.s32 1, %s22
    $region7: #{tpu_custom_call.1} parent=1 // loop_footer_branch
      %21 = sbr.rel target = $region3
    $region8: #{tpu_custom_call.1} parent=1 // loop_exit
      _
    %972 = vsyncpa [#allocation3], 1
    %s973 = scalar_lea.sflag [#allocation3], 1
    %974 = vsyncpa %s973, 1
    %975 = vsyncpa [#allocation4], 1
    %s976 = scalar_lea.sflag [#allocation4], 1
    %977 = vsyncpa %s976, 1

</llo_original>
